<compile_context>
chip_gen: v7x
topology: tpu7x:2x2x1
jax: 0.10.0
libtpu: 0.0.40
codegen_flags: <defaults>
</compile_context>

<pallas_src>
import jax
import jax.numpy as jnp
from jax.experimental import pallas as pl
from jax.experimental.pallas import tpu as pltpu


def _round_up(x: int, m: int) -> int:
    return ((x + m - 1) // m) * m


def _make_multiply_kernel(col: int):
    """Kernel closure over the (static) in-block attention column index."""

    def kernel(feat_ref, y_ref, out_ref):
        # feat_ref: (tm, C) features tile
        # y_ref:    (tm, kb) attention-source tile; static column slice -> (tm, 1)
        # Multiply in the promoted dtype (VPU), cast on store.
        attn = y_ref[:, col:col + 1]
        out_ref[...] = (feat_ref[...] * attn).astype(out_ref.dtype)

    return kernel


def multiply_features(features, y_features, attention_col, *, tm=None,
                      vmem_limit_bytes=32 << 20, donate_features=False):
    """features: (N, C); y_features: (N, K). Returns features * y_features[:, col:col+1]."""
    N, C = features.shape
    K = y_features.shape[1]
    itemsize = max(jnp.dtype(features.dtype).itemsize,
                   jnp.dtype(y_features.dtype).itemsize)

    # Attention tile: fetch only the 128-lane block that contains the column
    # (avoids streaming a wide y.features matrix just to use one column).
    if K <= 128:
        kb = K                       # equals full array dim -> always legal
        y_block_idx = 0
        col_in_block = int(attention_col)
    else:
        kb = 128                     # divisible by 128 -> legal
        y_block_idx = int(attention_col) // 128
        col_in_block = int(attention_col) % 128

    # Sublane alignment for the row tile (8 for 32-bit, 16 for bf16, 32 for 8-bit).
    row_align = max(8, 32 // jnp.dtype(features.dtype).itemsize)

    if tm is None:
        # VMEM accounting: lane (last) dims are padded to multiples of 128 in
        # VMEM regardless of the logical width.  Double-buffered feat-in +
        # y-in + out, kept well under the 32 MiB scoped limit (v7x-safe).
        c_vmem = _round_up(C, 128)
        k_vmem = _round_up(kb, 128)
        bytes_per_row = 2 * (2 * c_vmem + k_vmem) * itemsize
        budget = 8 << 20
        tm = max(row_align, (budget // bytes_per_row) // row_align * row_align)
        # Keep >= 4 grid steps when N is large enough: 2+ steps per
        # TensorCore under megacore sharding on v7x (pipelines the DMAs);
        # harmless on single-TC v5e/v6e.
        quarter = _round_up(max(1, -(-N // 4)), row_align)
        tm = min(tm, quarter)
    tm = int(tm)

    grid = (pl.cdiv(N, tm),)

    extra = {}
    if donate_features:
        # Optional: callers that can donate x.features save one N*C HBM buffer.
        extra["input_output_aliases"] = {0: 0}

    out = pl.pallas_call(
        _make_multiply_kernel(col_in_block),
        out_shape=jax.ShapeDtypeStruct((N, C), features.dtype),
        grid=grid,
        in_specs=[
            pl.BlockSpec((tm, C), lambda i: (i, 0)),
            pl.BlockSpec((tm, kb), lambda i: (i, y_block_idx)),
        ],
        out_specs=pl.BlockSpec((tm, C), lambda i: (i, 0)),
        compiler_params=pltpu.CompilerParams(
            dimension_semantics=("parallel",),
            vmem_limit_bytes=vmem_limit_bytes,
        ),
        **extra,
    )(features, y_features)
    return out


def multiply_forward(x_features, y):
    """JAX port of Multiply.forward on the feature matrices.

    x_features: (N, C) features of the sparse tensor x.
    y: either a plain (N, 1) / (N,) attention array ("torch.is_tensor(y)" branch),
       or a dict with key 'features' of shape (N, K) mimicking a
       SparseConvNetTensor, in which case column 1 is the attention (the
       column extraction is fused into the Pallas kernel).
    """
    # TODO(synk): SparseConvNetTensor metadata / spatial_size passthrough has
    # no tensor compute and is omitted.
    if isinstance(y, dict):
        return multiply_features(x_features, y["features"], attention_col=1)
    attn = y
    if attn.ndim == 1:
        attn = attn[:, None]
    return multiply_features(x_features, attn, attention_col=0)


if __name__ == "__main__":
    key = jax.random.PRNGKey(0)
    k1, k2, k3 = jax.random.split(key, 3)

    # "Ragged" sparse-tensor shapes: N not a multiple of the tile, C < 128.
    # Exercises the cdiv grid (masked edge block) and non-lane-aligned C path.
    N, C = 200, 96
    x_features = jax.random.normal(k1, (N, C), dtype=jnp.float32)

    # y as a SparseConvNetTensor-like object: attention is column 1 of its features.
    y_features = jax.random.uniform(k2, (N, 2), dtype=jnp.float32)
    out = jax.block_until_ready(multiply_forward(x_features, {"features": y_features}))
    ref = x_features * y_features[:, 1][:, None]
    assert out.shape == (N, C)
    assert jnp.allclose(out, ref, atol=1e-6, rtol=1e-6)

    # "y is a plain tensor" branch, lane-aligned shapes.
    N2, C2 = 256, 128
    x2 = jax.random.normal(k3, (N2, C2), dtype=jnp.float32)
    attn_direct = jax.random.uniform(jax.random.PRNGKey(3), (N2, 1), dtype=jnp.float32)
    out2 = jax.block_until_ready(multiply_forward(x2, attn_direct))
    assert out2.shape == (N2, C2)
    assert jnp.allclose(out2, x2 * attn_direct, atol=1e-6, rtol=1e-6)

    # Mixed-dtype check: bf16 features * f32 attention (promote in-kernel, cast on store).
    x3 = x_features.astype(jnp.bfloat16)
    out3 = jax.block_until_ready(multiply_forward(x3, {"features": y_features}))
    ref3 = (x3.astype(jnp.float32) * y_features[:, 1][:, None]).astype(jnp.bfloat16)
    assert out3.dtype == jnp.bfloat16
    assert jnp.allclose(out3.astype(jnp.float32), ref3.astype(jnp.float32),
                        atol=1e-2, rtol=1e-2)

    print("KERNEL_OK")
</pallas_src>

<mosaic_0001>
module attributes {stable_mosaic.version = 11 : i64} {
  func.func @kernel(%arg0: i32, %arg1: memref<56x96xf32, #tpu.memory_space<vmem>>, %arg2: memref<56x2xf32, #tpu.memory_space<vmem>>, %arg3: memref<56x96xf32, #tpu.memory_space<vmem>>) attributes {dimension_semantics = [#tpu.dimension_semantics<parallel>], iteration_bounds = array<i64: 4>, scalar_prefetch = 0 : i64, scratch_operands = 0 : i64, tpu.core_type = #tpu.core_type<tc>, window_params = [{transform_indices = @transform_0, window_bounds = array<i64: 56, 96>}, {transform_indices = @transform_1, window_bounds = array<i64: 56, 2>}, {transform_indices = @transform_2, window_bounds = array<i64: 56, 96>}]} {
    %c0 = arith.constant 0 : index
    %c1 = arith.constant 1 : index
    %0 = vector.load %arg2[%c0, %c1] : memref<56x2xf32, #tpu.memory_space<vmem>>, vector<56x1xf32>
    %c0_0 = arith.constant 0 : index
    %c0_1 = arith.constant 0 : index
    %1 = vector.load %arg1[%c0_0, %c0_1] : memref<56x96xf32, #tpu.memory_space<vmem>>, vector<56x96xf32>
    %2 = vector.broadcast %0 : vector<56x1xf32> to vector<56x96xf32>
    %3 = arith.mulf %1, %2 : vector<56x96xf32>
    %c0_2 = arith.constant 0 : index
    %c0_3 = arith.constant 0 : index
    %4 = vector.load %arg3[%c0_2, %c0_3] : memref<56x96xf32, #tpu.memory_space<vmem>>, vector<56x96xf32>
    tpu.vector_store %arg3[%c0_2, %c0_3], %3 {strides = array<i32>} : memref<56x96xf32, #tpu.memory_space<vmem>>, vector<56x96xf32>,
    return
  }
  func.func @transform_0(%arg0: i32) -> (i32, i32) {
    %c0_i32 = arith.constant 0 : i32
    %c0_i32_0 = arith.constant 0 : i32
    return %arg0, %c0_i32 : i32, i32
  }
  func.func @transform_1(%arg0: i32) -> (i32, i32) {
    %c0_i32 = arith.constant 0 : i32
    %c0_i32_0 = arith.constant 0 : i32
    return %arg0, %c0_i32 : i32, i32
  }
  func.func @transform_2(%arg0: i32) -> (i32, i32) {
    %c0_i32 = arith.constant 0 : i32
    %c0_i32_0 = arith.constant 0 : i32
    return %arg0, %c0_i32 : i32, i32
  }
}

</mosaic_0001>

<llo_original>
// kernel: tpu_custom_call.1
$region0: #{tpu_custom_call.1}
  #allocation0 [shape = 'u32[]', space=smem, size = 0x4, offset = 0x4, fixed_abs, tag = 'smem constant byte address 0x4 - core index']
  #allocation1 [shape = 'u32[144,128]{1,0:T(1,128)}', space=vmem, size = 0x12000, scoped, tag = 'internal scratch']
  %s0 = inlined_call_operand.vmem [shape: f32[200,96], index: 0, kind: input, shape index: {}]
  %s1 = inlined_call_operand.vmem [shape: f32[200,2], index: 1, kind: input, shape index: {}]
  %s2 = inlined_call_operand.vmem [shape: f32[200,96], index: 2, kind: output, shape index: {}]
  %s3 = sld [smem:[#allocation0]]
  $region89: #{tpu_custom_call.1} parent=0
    _
  %s5 = ssub.s32 1, %s3
  %s6 = scalar_select 0, %s5, %s3
  $region1: #{tpu_custom_call.1} parent=0
    #allocation2 [shape = 'u8[57344]{0}', space=vmem, size = 0xe000, scoped, tag = 'output window, operand 0']
    loop: start=0, step=1, limit=6
    $region2: #{tpu_custom_call.1} parent=1 // loop_pre_header
      _
    $region3: #{tpu_custom_call.1} parent=1 // loop_header
      %s8 = sphi 0, %s12
      %p9 = scmp.ge.s32.totalorder %s8, 6
      %s18 = sphi 0, %s20
      %s21 = sphi 0, %s18
      %s22 = sphi 0, %s21
      %s38 = sphi 0, %s22
      %s44 = sphi 0, %s46
      %s47 = sphi 0, %s44
      %s48 = sphi 0, %s47
      %s64 = sphi 0, %s48
      %s70 = sphi 0, %s72
      %s73 = sphi 0, %s70
      %s74 = sphi 0, %s73
      %s90 = sphi 0, %s74
    $region4: #{tpu_custom_call.1} parent=1 // loop_header_branch
      %11 = sbr.rel (%p9) target = $region8
    $region5: #{tpu_custom_call.1} parent=1 // loop_body
      %s13 = ssub.s32 %s8, 1
      %s14 = ssub.s32 %s8, 2
      %s15 = sadd.s32 %s8, 1
      %s16 = ssub.s32 %s8, %s15
      %p17 = scmp.eq.s32.totalorder %s16, 0
      %s19 = sadd.s32 %s18, 1
      %s20 = scalar_select %p17, %s18, %s19
      %p23 = pneg %p17
      %p24 = scmp.eq.s32.totalorder %s8, 3
      %p25 = por %p23, %p24
      %p26 = scmp.ne.s32.totalorder %s18, %s21
      %p27 = scmp.eq.s32.totalorder %s8, 0
      %p28 = por %p26, %p27
      %p29 = scmp.ne.s32.totalorder %s18, %s21
      %p30 = scmp.eq.s32.totalorder %s13, 3
      %p31 = por %p29, %p30
      %p32 = scmp.ne.s32.totalorder %s21, %s22
      %p33 = scmp.eq.s32.totalorder %s13, 0
      %p34 = por %p32, %p33
      %p35 = scmp.ne.s32.totalorder %s21, %s22
      %p36 = scmp.eq.s32.totalorder %s14, 3
      %p37 = por %p35, %p36
      %p39 = scmp.ne.s32.totalorder %s22, %s38
      %p40 = scmp.eq.s32.totalorder %s14, 0
      %p41 = por %p39, %p40
      %s42 = ssub.s32 %s8, %s15
      %p43 = scmp.eq.s32.totalorder %s42, 0
      %s45 = sadd.s32 %s44, 1
      %s46 = scalar_select %p43, %s44, %s45
      %p49 = pneg %p43
      %p50 = scmp.eq.s32.totalorder %s8, 3
      %p51 = por %p49, %p50
      %p52 = scmp.ne.s32.totalorder %s44, %s47
      %p53 = scmp.eq.s32.totalorder %s8, 0
      %p54 = por %p52, %p53
      %p55 = scmp.ne.s32.totalorder %s44, %s47
      %p56 = scmp.eq.s32.totalorder %s13, 3
      %p57 = por %p55, %p56
      %p58 = scmp.ne.s32.totalorder %s47, %s48
      %p59 = scmp.eq.s32.totalorder %s13, 0
      %p60 = por %p58, %p59
      %p61 = scmp.ne.s32.totalorder %s47, %s48
      %p62 = scmp.eq.s32.totalorder %s14, 3
      %p63 = por %p61, %p62
      %p65 = scmp.ne.s32.totalorder %s48, %s64
      %p66 = scmp.eq.s32.totalorder %s14, 0
      %p67 = por %p65, %p66
      %s68 = ssub.s32 %s8, %s15
      %p69 = scmp.eq.s32.totalorder %s68, 0
      %s71 = sadd.s32 %s70, 1
      %s72 = scalar_select %p69, %s70, %s71
      %p75 = pneg %p69
      %p76 = scmp.eq.s32.totalorder %s8, 3
      %p77 = por %p75, %p76
      %p78 = scmp.ne.s32.totalorder %s70, %s73
      %p79 = scmp.eq.s32.totalorder %s8, 0
      %p80 = por %p78, %p79
      %p81 = scmp.ne.s32.totalorder %s70, %s73
      %p82 = scmp.eq.s32.totalorder %s13, 3
      %p83 = por %p81, %p82
      %p84 = scmp.ne.s32.totalorder %s73, %s74
      %p85 = scmp.eq.s32.totalorder %s13, 0
      %p86 = por %p84, %p85
      %p87 = scmp.ne.s32.totalorder %s73, %s74
      %p88 = scmp.eq.s32.totalorder %s14, 3
      %p89 = por %p87, %p88
      %p91 = scmp.ne.s32.totalorder %s74, %s90
      %p92 = scmp.eq.s32.totalorder %s14, 0
      %p93 = por %p91, %p92
      %p94 = scmp.le.s32.totalorder 1, %s8
      %p95 = scmp.lt.s32.totalorder %s8, 5
      %p96 = pnand %p94, %p95
      %p97 = pneg %p96
      // Predicated region
      $region9: #{tpu_custom_call.1} parent=5 // pred_check
        _
      $region10: #{tpu_custom_call.1} parent=5 // pred_check_branch
        %99 = sbr.rel (%p96) target = $region12
      $region11: #{tpu_custom_call.1} parent=5 // pred_region
        %s100 = ssub.s32 %s8, 1
      $region12: #{tpu_custom_call.1} parent=5 // pred_fallthru
        _
      %p101 = scmp.lt.s32.totalorder %s8, 4
      // Predicated region
      $region13: #{tpu_custom_call.1} parent=5 // pred_check
        %p102 = pneg %p101
      $region14: #{tpu_custom_call.1} parent=5 // pred_check_branch
        %104 = sbr.rel (%p102) target = $region16
      $region15: #{tpu_custom_call.1} parent=5 // pred_region
        // Predicated region
        $region17: #{tpu_custom_call.1} parent=15 // pred_check
          %p105 = pneg %p28
        $region18: #{tpu_custom_call.1} parent=15 // pred_check_branch
          %107 = sbr.rel (%p105) target = $region20
        $region19: #{tpu_custom_call.1} parent=15 // pred_region
          %s108 = smul.u32 7, %s8
          %s109 = ssub.s32 25, %s108
          %p110 = scmp.lt.s32.totalorder %s109, 7
          %s111 = scalar_select %p110, %s109, 7
          %s112 = smul.u32 128, %s111
          %p113 = scmp.lt.s32.totalorder %s108, 24
          %s114 = scalar_select %p113, %s108, 24
          %s115 = smul.addr %s114, 8
          %s116 = scalar_lea.vmem %s0, %s115
          %s117 = smul.u32 7, %s8
          %s118 = ssub.s32 25, %s117
          %p119 = scmp.lt.s32.totalorder %s118, 7
          %s120 = scalar_select %p119, %s118, 7
          %s121 = smul.u32 128, %s120
        $region20: #{tpu_custom_call.1} parent=15 // pred_fallthru
          _
        // Predicated region
        $region21: #{tpu_custom_call.1} parent=15 // pred_check
          %p122 = pneg %p54
        $region22: #{tpu_custom_call.1} parent=15 // pred_check_branch
          %124 = sbr.rel (%p122) target = $region24
        $region23: #{tpu_custom_call.1} parent=15 // pred_region
          %s125 = smul.u32 7, %s8
          %s126 = ssub.s32 25, %s125
          %p127 = scmp.lt.s32.totalorder %s126, 7
          %s128 = scalar_select %p127, %s126, 7
          %s129 = smul.u32 128, %s128
          %p130 = scmp.lt.s32.totalorder %s125, 24
          %s131 = scalar_select %p130, %s125, 24
          %s132 = smul.addr %s131, 8
          %s133 = scalar_lea.vmem %s1, %s132
          %s134 = smul.u32 7, %s8
          %s135 = ssub.s32 25, %s134
          %p136 = scmp.lt.s32.totalorder %s135, 7
          %s137 = scalar_select %p136, %s135, 7
          %s138 = smul.u32 128, %s137
        $region24: #{tpu_custom_call.1} parent=15 // pred_fallthru
          _
      $region16: #{tpu_custom_call.1} parent=5 // pred_fallthru
        _
      %p139 = scmp.le.s32.totalorder 1, %s8
      %p140 = scmp.lt.s32.totalorder %s8, 5
      %p141 = pnand %p139, %p140
      %p142 = pneg %p141
      // Predicated region
      $region25: #{tpu_custom_call.1} parent=5 // pred_check
        _
      $region26: #{tpu_custom_call.1} parent=5 // pred_check_branch
        %144 = sbr.rel (%p141) target = $region28
      $region27: #{tpu_custom_call.1} parent=5 // pred_region
        %s145 = ssub.s32 %s8, 1
        %s146 = smul.u32 7, %s13
        %s147 = ssub.s32 25, %s146
        %p148 = scmp.lt.s32.totalorder %s147, 7
        %s149 = scalar_select %p148, %s147, 7
        %s150 = smul.u32 128, %s149
        %p151 = scmp.lt.s32.totalorder %s146, 24
        %s152 = scalar_select %p151, %s146, 24
        %s153 = smul.addr %s152, 8
        %s154 = scalar_lea.vmem %s0, %s153
        %p155 = pneg %p34
        %p156 = pneg %p31
        %s157 = smul.u32 7, %s13
        %s158 = ssub.s32 25, %s157
        %p159 = scmp.lt.s32.totalorder %s158, 7
        %s160 = scalar_select %p159, %s158, 7
        %s161 = smul.u32 128, %s160
        %p162 = scmp.lt.s32.totalorder %s157, 24
        %s163 = scalar_select %p162, %s157, 24
        %s164 = smul.addr %s163, 8
        %s165 = scalar_lea.vmem %s1, %s164
        %p166 = pneg %p60
        %p167 = pneg %p57
        %p168 = pneg %p86
        %p169 = pneg %p83
        %s170 = sand.u32 %s73, 1
        %s171 = sand.u32 %s73, 1
        %s172 = smul.addr %s171, 56
        %s173 = scalar_lea.vmem [#allocation2], %s172
        %s174 = smul.u32 7, %s13
        %s175 = ssub.s32 25, %s174
        %p176 = scmp.lt.s32.totalorder %s175, 7
        %s177 = scalar_select %p176, %s175, 7
        %s178 = smul.u32 128, %s177
        %p179 = scmp.lt.s32.totalorder %s174, 24
        %s180 = scalar_select %p179, %s174, 24
        %s181 = smul.addr %s180, 8
        %s182 = scalar_lea.vmem %s0, %s181
        %s183 = smul.u32 7, %s13
        %s184 = ssub.s32 25, %s183
        %p185 = scmp.lt.s32.totalorder %s184, 7
        %s186 = scalar_select %p185, %s184, 7
        %s187 = smul.u32 128, %s186
        %s188 = smul.u32 7, %s13
        %s189 = ssub.s32 25, %s188
        %p190 = scmp.lt.s32.totalorder %s189, 7
        %s191 = scalar_select %p190, %s189, 7
        %s192 = smul.u32 128, %s191
        %p193 = scmp.lt.s32.totalorder %s188, 24
        %s194 = scalar_select %p193, %s188, 24
        %s195 = smul.addr %s194, 8
        %s196 = scalar_lea.vmem %s1, %s195
        %s197 = smul.u32 7, %s13
        %s198 = ssub.s32 25, %s197
        %p199 = scmp.lt.s32.totalorder %s198, 7
        %s200 = scalar_select %p199, %s198, 7
        %s201 = smul.u32 128, %s200
        %s202 = smul.u32 7, %s13
        %s203 = ssub.s32 25, %s202
        %p204 = scmp.lt.s32.totalorder %s203, 7
        %s205 = scalar_select %p204, %s203, 7
        %s206 = smul.u32 128, %s205
        %v207 = vld [vmem:[%s196] sm:$0xff]
        %v208 = vld [vmem:[%s196 + $0x8] sm:$0xff]
        %v209 = vld [vmem:[%s196 + $0x10] sm:$0xff]
        %v210 = vld [vmem:[%s196 + $0x18] sm:$0xff]
        %v211 = vld [vmem:[%s196 + $0x20] sm:$0xff]
        %v212 = vld [vmem:[%s196 + $0x28] sm:$0xff]
        %v213 = vld [vmem:[%s196 + $0x30] sm:$0xff]
        %v214 = vld [vmem:[%s182] sm:$0xff]
        %v215 = vld [vmem:[%s182 + $0x8] sm:$0xff]
        %v216 = vld [vmem:[%s182 + $0x10] sm:$0xff]
        %v217 = vld [vmem:[%s182 + $0x18] sm:$0xff]
        %v218 = vld [vmem:[%s182 + $0x20] sm:$0xff]
        %v219 = vld [vmem:[%s182 + $0x28] sm:$0xff]
        %v220 = vld [vmem:[%s182 + $0x30] sm:$0xff]
        %222 = vset.pattern.permute.xlu0 1
        %223 = vperm.xlu0 %222, %v207
        %v224 = vpop.permute.xlu0 %223
        %227 = vset.pattern.permute.xlu0 1
        %228 = vperm.xlu0 %227, %v208
        %v229 = vpop.permute.xlu0 %228
        %232 = vset.pattern.permute.xlu0 1
        %233 = vperm.xlu0 %232, %v209
        %v234 = vpop.permute.xlu0 %233
        %237 = vset.pattern.permute.xlu0 1
        %238 = vperm.xlu0 %237, %v210
        %v239 = vpop.permute.xlu0 %238
        %242 = vset.pattern.permute.xlu0 1
        %243 = vperm.xlu0 %242, %v211
        %v244 = vpop.permute.xlu0 %243
        %247 = vset.pattern.permute.xlu0 1
        %248 = vperm.xlu0 %247, %v212
        %v249 = vpop.permute.xlu0 %248
        %252 = vset.pattern.permute.xlu0 1
        %253 = vperm.xlu0 %252, %v213
        %v254 = vpop.permute.xlu0 %253
        %v256 = vmul.f32 %v214, %v224
        %v257 = vmul.f32 %v215, %v229
        %v258 = vmul.f32 %v216, %v234
        %v259 = vmul.f32 %v217, %v239
        %v260 = vmul.f32 %v218, %v244
        %v261 = vmul.f32 %v219, %v249
        %v262 = vmul.f32 %v220, %v254
        %vm263 = vcmask 785408
        %264 = vst.msk [vmem:[%s173] sm:$0xff] %vm263, %v256
        %265 = vst.msk [vmem:[%s173 + $0x8] sm:$0xff] %vm263, %v257
        %266 = vst.msk [vmem:[%s173 + $0x10] sm:$0xff] %vm263, %v258
        %267 = vst.msk [vmem:[%s173 + $0x18] sm:$0xff] %vm263, %v259
        %268 = vst.msk [vmem:[%s173 + $0x20] sm:$0xff] %vm263, %v260
        %269 = vst.msk [vmem:[%s173 + $0x28] sm:$0xff] %vm263, %v261
        %270 = vst.msk [vmem:[%s173 + $0x30] sm:$0xff] %vm263, %v262
        %s271 = sand.u32 %s73, 1
        %s272 = sand.u32 %s73, 1
        %s273 = smul.addr %s272, 56
        %s274 = scalar_lea.vmem [#allocation2], %s273
        // Predicated region
        $region29: #{tpu_custom_call.1} parent=27 // pred_check
          %p275 = pneg %p83
        $region30: #{tpu_custom_call.1} parent=27 // pred_check_branch
          %277 = sbr.rel (%p275) target = $region32
        $region31: #{tpu_custom_call.1} parent=27 // pred_region
          %s278 = smul.u32 7, %s13
          %s279 = ssub.s32 25, %s278
          %p280 = scmp.lt.s32.totalorder %s279, 7
          %s281 = scalar_select %p280, %s279, 7
          %s282 = smul.u32 128, %s281
          %p283 = scmp.ne.s32.totalorder 0, %s282
          %s284 = smul.addr %s278, 8
          %s285 = scalar_lea.vmem %s2, %s284
          // Predicated region
          $region33: #{tpu_custom_call.1} parent=31 // pred_check
            %p286 = pneg %p283
          $region34: #{tpu_custom_call.1} parent=31 // pred_check_branch
            %288 = sbr.rel (%p286) target = $region36
          $region35: #{tpu_custom_call.1} parent=31 // pred_region
            // Predicated region
            $region37: #{tpu_custom_call.1} parent=35 // pred_check
              _
            $region38: #{tpu_custom_call.1} parent=35 // pred_check_branch
              %290 = sbr.rel (0) target = $region40
            $region39: #{tpu_custom_call.1} parent=35 // pred_region
              // Predicated region
              $region59: #{tpu_custom_call.1} parent=39 // pred_check
                _
              $region60: #{tpu_custom_call.1} parent=39 // pred_check_branch
                %352 = sbr.rel (0) target = $region62
              $region61: #{tpu_custom_call.1} parent=39 // pred_region
                %s353 = sdiv.u32.pop %s281, 7
                %s354 = srem.u32.pop %s281, 7
                // While loop
                $region63: #{tpu_custom_call.1} parent=61 // loop_pre_header
                  _
                $region64: #{tpu_custom_call.1} parent=61 // loop_header
                  %s356 = sphi 0, %s358
                  %p357 = scmp.ge.s32.totalorder %s356, %s353
                  %s361 = sphi 0, %s380
                  %s362 = sphi %s274, %s383
                  %s363 = sphi %s285, %s384
                $region65: #{tpu_custom_call.1} parent=61 // loop_header_branch
                  %360 = sbr.rel (%p357) target = $region69
                $region66: #{tpu_custom_call.1} parent=61 // loop_body
                  %v364 = vld [vmem:[%s362] sm:$0xff]
                  %365 = vst [vmem:[%s363] sm:$0xff] %v364
                  %v366 = vld [vmem:[%s362 + $0x8] sm:$0xff]
                  %367 = vst [vmem:[%s363 + $0x8] sm:$0xff] %v366
                  %v368 = vld [vmem:[%s362 + $0x10] sm:$0xff]
                  %369 = vst [vmem:[%s363 + $0x10] sm:$0xff] %v368
                  %v370 = vld [vmem:[%s362 + $0x18] sm:$0xff]
                  %371 = vst [vmem:[%s363 + $0x18] sm:$0xff] %v370
                  %v372 = vld [vmem:[%s362 + $0x20] sm:$0xff]
                  %373 = vst [vmem:[%s363 + $0x20] sm:$0xff] %v372
                  %v374 = vld [vmem:[%s362 + $0x28] sm:$0xff]
                  %375 = vst [vmem:[%s363 + $0x28] sm:$0xff] %v374
                  %v376 = vld [vmem:[%s362 + $0x30] sm:$0xff]
                  %377 = vst [vmem:[%s363 + $0x30] sm:$0xff] %v376
                  %s378 = sadd.s32 1, %s361
                  %p379 = scmp.ge.s32.totalorder %s378, %s353
                  %s380 = scalar_select %p379, 0, %s378
                  %s381 = smul.u32 %s380, 56
                  %s382 = smul.u32 %s380, 56
                  %s383 = scalar_lea.vmem %s274, %s381 [#allocation2]
                  %s384 = scalar_lea.vmem %s285, %s382
                $region67: #{tpu_custom_call.1} parent=61 // loop_footer
                  %s358 = sadd.s32 %s356, 1
                $region68: #{tpu_custom_call.1} parent=61 // loop_footer_branch
                  %355 = sbr.rel target = $region64
                $region69: #{tpu_custom_call.1} parent=61 // loop_exit
                  _
                %s385 = sdiv.u32.pop %s281, 7
                %s386 = srem.u32.pop %s281, 7
                %s387 = smul.u32 %s385, 7
                %s388 = smul.u32 8, %s387
                %s389 = scalar_lea.vmem %s274, %s388 [#allocation2]
                %s390 = smul.u32 8, %s387
                %s391 = scalar_lea.vmem %s285, %s390
                // While loop
                $region70: #{tpu_custom_call.1} parent=61 // loop_pre_header
                  _
                $region71: #{tpu_custom_call.1} parent=61 // loop_header
                  %s393 = sphi 0, %s395
                  %p394 = scmp.ge.s32.totalorder %s393, %s386
                  %s398 = sphi 0, %s405
                  %s399 = sphi %s389, %s408
                  %s400 = sphi %s391, %s409
                $region72: #{tpu_custom_call.1} parent=61 // loop_header_branch
                  %397 = sbr.rel (%p394) target = $region76
                $region73: #{tpu_custom_call.1} parent=61 // loop_body
                  %v401 = vld [vmem:[%s399] sm:$0xff]
                  %402 = vst [vmem:[%s400] sm:$0xff] %v401
                  %s403 = sadd.s32 1, %s398
                  %p404 = scmp.ge.s32.totalorder %s403, %s386
                  %s405 = scalar_select %p404, 0, %s403
                  %s406 = smul.u32 %s405, 8
                  %s407 = smul.u32 %s405, 8
                  %s408 = scalar_lea.vmem %s389, %s406 [#allocation2]
                  %s409 = scalar_lea.vmem %s391, %s407
                $region74: #{tpu_custom_call.1} parent=61 // loop_footer
                  %s395 = sadd.s32 %s393, 1
                $region75: #{tpu_custom_call.1} parent=61 // loop_footer_branch
                  %392 = sbr.rel target = $region71
                $region76: #{tpu_custom_call.1} parent=61 // loop_exit
                  _
              $region62: #{tpu_custom_call.1} parent=39 // pred_fallthru
                _
              // Predicated region
              $region77: #{tpu_custom_call.1} parent=39 // pred_check
                _
              $region78: #{tpu_custom_call.1} parent=39 // pred_check_branch
                %411 = sbr.rel target = $region80
              $region79: #{tpu_custom_call.1} parent=39 // pred_region
                _
              $region80: #{tpu_custom_call.1} parent=39 // pred_fallthru
                _
            $region40: #{tpu_custom_call.1} parent=35 // pred_fallthru
              _
            // Predicated region
            $region41: #{tpu_custom_call.1} parent=35 // pred_check
              _
            $region42: #{tpu_custom_call.1} parent=35 // pred_check_branch
              %292 = sbr.rel target = $region44
            $region43: #{tpu_custom_call.1} parent=35 // pred_region
              %s294 = sdiv.u32.pop %s281, 7
              %s295 = srem.u32.pop %s281, 7
              // While loop
              $region45: #{tpu_custom_call.1} parent=43 // loop_pre_header
                _
              $region46: #{tpu_custom_call.1} parent=43 // loop_header
                %s297 = sphi 0, %s299
                %p298 = scmp.ge.s32.totalorder %s297, %s294
                %s302 = sphi 0, %s321
                %s303 = sphi %s274, %s324
                %s304 = sphi %s285, %s325
              $region47: #{tpu_custom_call.1} parent=43 // loop_header_branch
                %301 = sbr.rel (%p298) target = $region51
              $region48: #{tpu_custom_call.1} parent=43 // loop_body
                %v305 = vld [vmem:[%s303] sm:$0xff]
                %306 = vst [vmem:[%s304] sm:$0xff] %v305
                %v307 = vld [vmem:[%s303 + $0x8] sm:$0xff]
                %308 = vst [vmem:[%s304 + $0x8] sm:$0xff] %v307
                %v309 = vld [vmem:[%s303 + $0x10] sm:$0xff]
                %310 = vst [vmem:[%s304 + $0x10] sm:$0xff] %v309
                %v311 = vld [vmem:[%s303 + $0x18] sm:$0xff]
                %312 = vst [vmem:[%s304 + $0x18] sm:$0xff] %v311
                %v313 = vld [vmem:[%s303 + $0x20] sm:$0xff]
                %314 = vst [vmem:[%s304 + $0x20] sm:$0xff] %v313
                %v315 = vld [vmem:[%s303 + $0x28] sm:$0xff]
                %316 = vst [vmem:[%s304 + $0x28] sm:$0xff] %v315
                %v317 = vld [vmem:[%s303 + $0x30] sm:$0xff]
                %318 = vst [vmem:[%s304 + $0x30] sm:$0xff] %v317
                %s319 = sadd.s32 1, %s302
                %p320 = scmp.ge.s32.totalorder %s319, %s294
                %s321 = scalar_select %p320, 0, %s319
                %s322 = smul.u32 %s321, 56
                %s323 = smul.u32 %s321, 56
                %s324 = scalar_lea.vmem %s274, %s322 [#allocation2]
                %s325 = scalar_lea.vmem %s285, %s323
              $region49: #{tpu_custom_call.1} parent=43 // loop_footer
                %s299 = sadd.s32 %s297, 1
              $region50: #{tpu_custom_call.1} parent=43 // loop_footer_branch
                %296 = sbr.rel target = $region46
              $region51: #{tpu_custom_call.1} parent=43 // loop_exit
                _
              %s326 = sdiv.u32.pop %s281, 7
              %s327 = srem.u32.pop %s281, 7
              %s328 = smul.u32 %s326, 7
              %s329 = smul.u32 8, %s328
              %s330 = scalar_lea.vmem %s274, %s329 [#allocation2]
              %s331 = smul.u32 8, %s328
              %s332 = scalar_lea.vmem %s285, %s331
              // While loop
              $region52: #{tpu_custom_call.1} parent=43 // loop_pre_header
                _
              $region53: #{tpu_custom_call.1} parent=43 // loop_header
                %s334 = sphi 0, %s336
                %p335 = scmp.ge.s32.totalorder %s334, %s327
                %s339 = sphi 0, %s346
                %s340 = sphi %s330, %s349
                %s341 = sphi %s332, %s350
              $region54: #{tpu_custom_call.1} parent=43 // loop_header_branch
                %338 = sbr.rel (%p335) target = $region58
              $region55: #{tpu_custom_call.1} parent=43 // loop_body
                %v342 = vld [vmem:[%s340] sm:$0xff]
                %343 = vst [vmem:[%s341] sm:$0xff] %v342
                %s344 = sadd.s32 1, %s339
                %p345 = scmp.ge.s32.totalorder %s344, %s327
                %s346 = scalar_select %p345, 0, %s344
                %s347 = smul.u32 %s346, 8
                %s348 = smul.u32 %s346, 8
                %s349 = scalar_lea.vmem %s330, %s347 [#allocation2]
                %s350 = scalar_lea.vmem %s332, %s348
              $region56: #{tpu_custom_call.1} parent=43 // loop_footer
                %s336 = sadd.s32 %s334, 1
              $region57: #{tpu_custom_call.1} parent=43 // loop_footer_branch
                %333 = sbr.rel target = $region53
              $region58: #{tpu_custom_call.1} parent=43 // loop_exit
                _
            $region44: #{tpu_custom_call.1} parent=35 // pred_fallthru
              _
          $region36: #{tpu_custom_call.1} parent=31 // pred_fallthru
            _
          %412 = vnop
        $region32: #{tpu_custom_call.1} parent=27 // pred_fallthru
          _
      $region28: #{tpu_custom_call.1} parent=5 // pred_fallthru
        _
      %p413 = scmp.le.s32.totalorder 2, %s8
      // Predicated region
      $region81: #{tpu_custom_call.1} parent=5 // pred_check
        %p414 = pneg %p413
      $region82: #{tpu_custom_call.1} parent=5 // pred_check_branch
        %416 = sbr.rel (%p414) target = $region84
      $region83: #{tpu_custom_call.1} parent=5 // pred_region
        %s417 = ssub.s32 %s8, 2
        // Predicated region
        $region85: #{tpu_custom_call.1} parent=83 // pred_check
          %p418 = pneg %p89
        $region86: #{tpu_custom_call.1} parent=83 // pred_check_branch
          %420 = sbr.rel (%p418) target = $region88
        $region87: #{tpu_custom_call.1} parent=83 // pred_region
          %s421 = sand.u32 %s74, 1
          %s422 = sand.u32 %s74, 1
          %s423 = smul.addr %s422, 56
          %s424 = scalar_lea.vmem [#allocation2], %s423
        $region88: #{tpu_custom_call.1} parent=83 // pred_fallthru
          _
      $region84: #{tpu_custom_call.1} parent=5 // pred_fallthru
        _
    $region6: #{tpu_custom_call.1} parent=1 // loop_footer
      %s12 = sadd.s32 1, %s8
    $region7: #{tpu_custom_call.1} parent=1 // loop_footer_branch
      %7 = sbr.rel target = $region3
    $region8: #{tpu_custom_call.1} parent=1 // loop_exit
      _

</llo_original>
